<compile_context>
chip_gen: v7x
topology: tpu7x:2x2x1
jax: 0.10.0
libtpu: 0.0.40
codegen_flags: <defaults>
</compile_context>

<pallas_src>
import functools
import numpy as np
import jax
import jax.numpy as jnp
from jax.experimental import pallas as pl
from jax.experimental.pallas import tpu as pltpu


# ----------------------------------------------------------------------------
# Host-side glue: weights, bands, tiling.
# ----------------------------------------------------------------------------
def _round_up(x: int, m: int) -> int:
    return ((x + m - 1) // m) * m


def _cdiv(a: int, b: int) -> int:
    return -(-a // b)


def bilinear_aa_weight_matrix(in_size: int, out_size: int) -> np.ndarray:
    """PIL/torchvision bilinear-with-antialias row weights, shape (out, in).

    Vectorized numpy (no Python per-pixel loop), identical math to PIL:
      center = (i + 0.5) * scale, triangle filter, support widened by the scale
      when downscaling (antialias), normalized per output row.
    """
    scale = in_size / out_size
    fscale = max(scale, 1.0)            # antialias widens support when downscaling
    support = 1.0 * fscale              # triangle filter support = 1
    centers = (np.arange(out_size) + 0.5) * scale
    xmin = np.maximum((centers - support + 0.5).astype(np.int64), 0)
    xmax = np.minimum((centers + support + 0.5).astype(np.int64), in_size)
    ntaps = max(int((xmax - xmin).max()), 1)
    x = xmin[:, None] + np.arange(ntaps)[None, :]                # (out, ntaps)
    w = 1.0 - np.abs((x - centers[:, None] + 0.5) / fscale)      # triangle
    w = np.where(x < xmax[:, None], np.maximum(w, 0.0), 0.0)
    tot = w.sum(axis=1, keepdims=True)
    w = np.where(tot > 0.0, w / np.where(tot > 0.0, tot, 1.0), 0.0)
    W = np.zeros((out_size, in_size), dtype=np.float32)
    rows = np.repeat(np.arange(out_size), ntaps)
    cols = np.clip(x, 0, in_size - 1).reshape(-1)
    np.add.at(W, (rows, cols), w.reshape(-1).astype(np.float32))  # OOB taps add 0
    return W


def nearest_indices(in_size: int, out_size: int) -> np.ndarray:
    """torch 'nearest' source indices: floor(dst * in/out), clamped."""
    idx = np.floor(np.arange(out_size) * (in_size / out_size)).astype(np.int64)
    return np.clip(idx, 0, in_size - 1).astype(np.int32)


def _choose_tile(extent: int, unit: int, cap: int):
    """Tile size (multiple of `unit`, <= cap unless extent is smaller) + padded total."""
    padded = _round_up(extent, unit)
    if padded <= cap:
        return padded, padded
    ntiles = _cdiv(padded, cap)
    tile = unit * _cdiv(padded // unit, ntiles)
    return tile, tile * ntiles


def _band_params(w_pad: np.ndarray, tile: int, align: int, in_size: int):
    """Per-output-tile input-band start offsets (aligned) + static band width."""
    out_pad = w_pad.shape[0]
    n_tiles = out_pad // tile
    starts = np.zeros((n_tiles,), dtype=np.int32)
    span = 1
    for t in range(n_tiles):
        rows = w_pad[t * tile:(t + 1) * tile]
        nz = np.nonzero(rows.sum(axis=0) > 0.0)[0]   # weights are non-negative
        lo, hi = (int(nz[0]), int(nz[-1]) + 1) if nz.size else (0, 1)
        lo = (lo // align) * align                   # align DMA start offsets
        starts[t] = lo
        span = max(span, hi - lo)
    band = _round_up(span, align)
    in_pad = _round_up(max(in_size, int(starts.max()) + band), align)
    return starts, band, in_pad


def _band_compact(w_pad: np.ndarray, starts: np.ndarray, tile: int, band: int):
    """(out_pad, in) dense weights -> (out_pad, band) band-compacted weights."""
    out_pad, in_size = w_pad.shape
    wb = np.zeros((out_pad, band), dtype=np.float32)
    for t in range(out_pad // tile):
        s = int(starts[t])
        width = min(band, in_size - s)
        if width > 0:
            wb[t * tile:(t + 1) * tile, :width] = w_pad[t * tile:(t + 1) * tile, s:s + width]
    return wb


def _vmem_budget():
    """(tile-selection VMEM budget, vmem_limit_bytes) per TPU generation."""
    try:
        kind = jax.devices()[0].device_kind.lower()
    except Exception:  # pragma: no cover - defensive
        kind = ""
    if any(g in kind for g in ("v4", "v5", "v6")):
        return 80 * 1024 * 1024, 100 * 1024 * 1024     # 128 MiB physical VMEM
    return 36 * 1024 * 1024, 56 * 1024 * 1024          # v7x / unknown: 64 MiB VMEM


def _vmem_estimate(C, TM, TN, band_h, band_w):
    band = C * band_h * band_w * 2                 # bf16 band scratch
    whb = 2 * TM * band_h * 2                      # double-buffered bf16 row weights
    wwtb = 2 * band_w * TN * 2                     # double-buffered bf16 col weights
    outb = 2 * C * TM * TN * 4                     # double-buffered f32 output block
    inter = max(TM * band_w, band_h * TN) * 4      # f32 matmul intermediate
    return band + whb + wwtb + outb + inter


# ----------------------------------------------------------------------------
# Pallas kernel: one (C, TM, TN) output tile = wh_tile @ band_c @ wwT_tile, per c
# ----------------------------------------------------------------------------
def _resize_tile_kernel(rows_first, C, band_h, band_w,
                        rstart_ref, cstart_ref,          # SMEM scalar prefetch
                        wh_ref, wwt_ref, img_ref,        # inputs (img in HBM/ANY)
                        out_ref,                         # (C, TM, TN) output block
                        band_ref, sem_ref):              # VMEM band + per-chan DMA sems
    t = pl.program_id(0)
    u = pl.program_id(1)
    r0 = pl.multiple_of(rstart_ref[t], 16)
    c0 = pl.multiple_of(cstart_ref[u], 128)

    def band_copy(c):
        return pltpu.make_async_copy(
            img_ref.at[c, pl.ds(r0, band_h), pl.ds(c0, band_w)],
            band_ref.at[c], sem_ref.at[c])

    # Issue every channel's band DMA up front: channel c's matmuls then overlap
    # the in-flight transfers of channels c+1..C-1 (hides most of the fetch).
    for c in range(C):
        band_copy(c).start()

    wh = wh_ref[...]
    wwt = wwt_ref[...]
    for c in range(C):                 # static, fully unrolled (C is small)
        band_copy(c).wait()
        band = band_ref[c]
        # NOTE: bf16 inputs/weights/intermediate -> ~0.4-1% deviation vs f32/PIL;
        # keep the intermediate f32 (at extra MXU cost) if closer parity is needed.
        if rows_first:
            tmp = jnp.dot(wh, band, preferred_element_type=jnp.float32)
            out = jnp.dot(tmp.astype(jnp.bfloat16), wwt,
                          preferred_element_type=jnp.float32)
        else:
            tmp = jnp.dot(band, wwt, preferred_element_type=jnp.float32)
            out = jnp.dot(wh, tmp.astype(jnp.bfloat16),
                          preferred_element_type=jnp.float32)
        out_ref[c] = out.astype(out_ref.dtype)


# ----------------------------------------------------------------------------
# Per-output-shape builder (cached: one Mosaic compile per (C,H,W,new_h,new_w)).
# ----------------------------------------------------------------------------
@functools.lru_cache(maxsize=128)
def _build_resize_fn(C, H, W, new_h, new_w, out_dtype_name="float32"):
    out_dtype = np.dtype(out_dtype_name)
    budget, vmem_limit = _vmem_budget()

    wh_full = bilinear_aa_weight_matrix(H, new_h)      # (new_h, H)
    ww_full = bilinear_aa_weight_matrix(W, new_w)      # (new_w, W)

    # ---- pick tiles under an explicit per-generation VMEM budget ----
    tm_cap, tn_cap = 256, 1024
    for _ in range(32):
        TM, h_pad = _choose_tile(new_h, 16, tm_cap)
        TN, w_pad = _choose_tile(new_w, 128, tn_cap)
        wh = np.zeros((h_pad, H), np.float32); wh[:new_h] = wh_full
        ww = np.zeros((w_pad, W), np.float32); ww[:new_w] = ww_full
        rstart, band_h, h_in_pad = _band_params(wh, TM, 16, H)
        cstart, band_w, w_in_pad = _band_params(ww, TN, 128, W)
        n_t = _cdiv(new_h, TM)
        n_u = _cdiv(new_w, TN)
        if (_vmem_estimate(C, TM, TN, band_h, band_w) > budget
                and (tn_cap > 128 or tm_cap > 16)):
            if tn_cap > 128:
                tn_cap = max(128, tn_cap // 2)
            else:
                tm_cap = max(16, tm_cap // 2)
            continue
        if n_t * n_u == 1 and TN >= 256:
            tn_cap = TN // 2      # keep >= 2 "parallel" grid steps for v7x megacore
            continue
        break

    wh_band = _band_compact(wh, rstart, TM, band_h)               # (h_pad, band_h)
    wwt_band = _band_compact(ww, cstart, TN, band_w).T.copy()     # (band_w, w_pad)

    # static contraction order: cheaper FLOPs; on a near-tie prefer the smaller
    # f32 intermediate (less internal scratch pressure on v7x's tighter VMEM).
    flops_rf = TM * band_w * (band_h + TN)
    flops_cf = band_h * TN * (band_w + TM)
    if abs(flops_rf - flops_cf) <= 0.2 * min(flops_rf, flops_cf):
        rows_first = TM * band_w <= band_h * TN
    else:
        rows_first = flops_rf < flops_cf

    steps = n_t * n_u
    flops = 2 * steps * C * (flops_rf if rows_first else flops_cf)
    bytes_accessed = steps * (C * band_h * band_w * 2 + TM * band_h * 2
                              + band_w * TN * 2 + C * TM * TN * out_dtype.itemsize)

    kernel = functools.partial(_resize_tile_kernel, rows_first, C, band_h, band_w)
    resize = pl.pallas_call(
        kernel,
        # exact output shape: trailing partial tiles use masked stores (no
        # post-kernel slice / extra HBM round-trip).
        out_shape=jax.ShapeDtypeStruct((C, new_h, new_w), out_dtype),
        grid_spec=pltpu.PrefetchScalarGridSpec(
            num_scalar_prefetch=2,
            grid=(n_t, n_u),
            in_specs=[
                pl.BlockSpec((TM, band_h), lambda t, u, *_: (t, 0)),
                pl.BlockSpec((band_w, TN), lambda t, u, *_: (0, u)),
                pl.BlockSpec(memory_space=pl.ANY),   # image stays in HBM; manual DMA
            ],
            out_specs=pl.BlockSpec((C, TM, TN), lambda t, u, *_: (0, t, u)),
            scratch_shapes=[
                pltpu.VMEM((C, band_h, band_w), jnp.bfloat16),
                pltpu.SemaphoreType.DMA((C,)),
            ],
        ),
        compiler_params=pltpu.CompilerParams(
            dimension_semantics=("parallel", "parallel"),
            vmem_limit_bytes=vmem_limit,
        ),
        cost_estimate=pl.CostEstimate(flops=int(flops), transcendentals=0,
                                      bytes_accessed=int(bytes_accessed)),
    )

    wh_dev = jnp.asarray(wh_band, dtype=jnp.bfloat16)
    wwt_dev = jnp.asarray(wwt_band, dtype=jnp.bfloat16)
    rstart_dev = jnp.asarray(rstart)
    cstart_dev = jnp.asarray(cstart)
    pad_h, pad_w = h_in_pad - H, w_in_pad - W

    @jax.jit
    def _apply(image, rstart_a, cstart_a, wh_a, wwt_a):
        img = jnp.pad(image.astype(jnp.bfloat16),
                      ((0, 0), (0, pad_h), (0, pad_w)))
        return resize(rstart_a, cstart_a, wh_a, wwt_a, img)

    def apply(image):
        return _apply(image, rstart_dev, cstart_dev, wh_dev, wwt_dev)

    return apply


def bilinear_resize_image(image: jax.Array, new_h: int, new_w: int,
                          out_dtype=jnp.float32) -> jax.Array:
    """image: (C, H, W) float -> (C, new_h, new_w), bilinear + antialias.

    Pass out_dtype=jnp.bfloat16 on v5e (lowest HBM BW / one vst slot) if the
    downstream pipeline tolerates it: halves the output writeback stream.
    """
    C, H, W = image.shape
    fn = _build_resize_fn(int(C), int(H), int(W), int(new_h), int(new_w),
                          np.dtype(out_dtype).name)
    return fn(image)


def nearest_resize_target(target: jax.Array, new_h: int, new_w: int) -> jax.Array:
    """Exact torch 'nearest' resize of an HW label map (integer gather only)."""
    H, W = target.shape
    idx_h = jnp.asarray(nearest_indices(H, new_h))
    idx_w = jnp.asarray(nearest_indices(W, new_w))
    # Row (sublane-axis) gathers + transposes only: avoids the slow TPU
    # lane-axis gather path that jnp.take(..., axis=1) would lower to.
    rows = jnp.take(target, idx_h, axis=0)
    return jnp.take(rows.T, idx_w, axis=0).T


# ----------------------------------------------------------------------------
# RandomResize forward
# ----------------------------------------------------------------------------
def random_resize(data: dict, min_scale: float, max_scale: float,
                  rng: np.random.Generator = None, size_quantum: int = 1) -> dict:
    if rng is None:
        rng = np.random.default_rng()
    # torch.empty(1).uniform_ is a host-side draw; numpy keeps the scale on the
    # host (the output *shape* depends on it) with no device->host sync.
    scale = float(rng.uniform(min_scale, max_scale))

    image = data["image"]      # (C, H, W) float32
    target = data["target"]    # (H, W) integer label map

    H, W = image.shape[-2:]
    new_h = int(round(H * scale))   # round-half-to-even, matches torch.round
    new_w = int(round(W * scale))
    if size_quantum > 1:
        # optional: quantize the output size to bound the number of distinct
        # compiled kernels (the builder above is lru-cached per output shape).
        new_h = max(size_quantum, int(round(new_h / size_quantum)) * size_quantum)
        new_w = max(size_quantum, int(round(new_w / size_quantum)) * size_quantum)

    image_out = bilinear_resize_image(image, new_h, new_w)
    target_out = nearest_resize_target(target, new_h, new_w)
    return {"image": image_out, "target": target_out}


if __name__ == "__main__":
    key = jax.random.PRNGKey(0)
    k_img, k_tgt = jax.random.split(key, 2)

    C, H, W = 4, 16, 16
    image = jax.random.normal(k_img, (C, H, W), dtype=jnp.float32)
    target = jax.random.randint(k_tgt, (H, W), 0, 10, dtype=jnp.int32)

    data = {"image": image, "target": target}
    out = random_resize(data, min_scale=0.5, max_scale=2.0,
                        rng=np.random.default_rng(0))

    img_out = jax.block_until_ready(out["image"])
    tgt_out = jax.block_until_ready(out["target"])

    assert img_out.shape[0] == C
    assert img_out.shape[1:] == tgt_out.shape
    assert tgt_out.dtype == target.dtype

    # sanity check vs a dense f32 host reference (loose tol: bf16 MXU inputs)
    new_h, new_w = img_out.shape[1:]
    wh_ref = bilinear_aa_weight_matrix(H, new_h)
    ww_ref = bilinear_aa_weight_matrix(W, new_w)
    ref = np.einsum("oh,chw,pw->cop", wh_ref, np.asarray(image, np.float32), ww_ref)
    err = float(np.max(np.abs(np.asarray(img_out, np.float32) - ref)))
    assert err < 0.15, f"max abs err {err}"

    # target reference: exact nearest gather
    idx_h = nearest_indices(H, new_h)
    idx_w = nearest_indices(W, new_w)
    tgt_ref = np.asarray(target)[idx_h][:, idx_w]
    assert np.array_equal(np.asarray(tgt_out), tgt_ref)

    print("KERNEL_OK")
</pallas_src>

<mosaic_0001>
module attributes {stable_mosaic.version = 11 : i64} {
  func.func @_resize_tile_kernel(%arg0: i32, %arg1: i32, %arg2: memref<1xi32, #tpu.memory_space<smem>>, %arg3: memref<1xi32, #tpu.memory_space<smem>>, %arg4: memref<32x16xbf16, #tpu.memory_space<vmem>>, %arg5: memref<128x128xbf16, #tpu.memory_space<vmem>>, %arg6: memref<4x16x128xbf16, #tpu.memory_space<any>>, %arg7: memref<4x32x128xf32, #tpu.memory_space<vmem>>, %arg8: memref<4x16x128xbf16, #tpu.memory_space<vmem>>, %arg9: memref<4x!tpu.dma_semaphore, #tpu.memory_space<semaphore_mem>>) attributes {dimension_semantics = [#tpu.dimension_semantics<parallel>, #tpu.dimension_semantics<parallel>], iteration_bounds = array<i64: 1, 1>, scalar_prefetch = 2 : i64, scratch_operands = 2 : i64, tpu.core_type = #tpu.core_type<tc>, window_params = [{transform_indices = @transform_0, window_bounds = array<i64: 32, 16>}, {transform_indices = @transform_1, window_bounds = array<i64: 128, 128>}, {}, {transform_indices = @transform_3, window_bounds = array<i64: 4, 32, 128>}]} {
    %0 = arith.index_cast %arg0 : i32 to index
    %1 = memref.load %arg2[%0] : memref<1xi32, #tpu.memory_space<smem>>
    %2 = tpu.assume_multiple %1, 16 : i32
    %3 = arith.index_cast %arg1 : i32 to index
    %4 = memref.load %arg3[%3] : memref<1xi32, #tpu.memory_space<smem>>
    %5 = tpu.assume_multiple %4, 128 : i32
    %c0_i32 = arith.constant 0 : i32
    %c0_i32_0 = arith.constant 0 : i32
    %c0_i32_1 = arith.constant 0 : i32
    %6 = tpu.memref_slice %arg6[%c0_i32, %2, %5] : memref<4x16x128xbf16, #tpu.memory_space<any>> -> memref<1x16x128xbf16, #tpu.memory_space<any>>
    %7 = tpu.memref_squeeze %6 : memref<1x16x128xbf16, #tpu.memory_space<any>> -> memref<16x128xbf16, #tpu.memory_space<any>>
    %c0_i32_2 = arith.constant 0 : i32
    %c0_i32_3 = arith.constant 0 : i32
    %8 = tpu.memref_slice %arg8[%c0_i32_0, %c0_i32_2, %c0_i32_3] : memref<4x16x128xbf16, #tpu.memory_space<vmem>> -> memref<1x16x128xbf16, #tpu.memory_space<vmem>>
    %9 = tpu.memref_squeeze %8 : memref<1x16x128xbf16, #tpu.memory_space<vmem>> -> memref<16x128xbf16, #tpu.memory_space<vmem>>
    %10 = tpu.memref_slice %arg9[%c0_i32_1] : memref<4x!tpu.dma_semaphore, #tpu.memory_space<semaphore_mem>> -> memref<1x!tpu.dma_semaphore, #tpu.memory_space<semaphore_mem>>
    %11 = tpu.memref_squeeze %10 : memref<1x!tpu.dma_semaphore, #tpu.memory_space<semaphore_mem>> -> memref<!tpu.dma_semaphore, #tpu.memory_space<semaphore_mem>>
    tpu.enqueue_dma source(%7 : memref<16x128xbf16, #tpu.memory_space<any>>) target(%9 : memref<16x128xbf16, #tpu.memory_space<vmem>>) target_semaphore(%11 : memref<!tpu.dma_semaphore, #tpu.memory_space<semaphore_mem>>)
    %c1_i32 = arith.constant 1 : i32
    %c1_i32_4 = arith.constant 1 : i32
    %c1_i32_5 = arith.constant 1 : i32
    %12 = tpu.memref_slice %arg6[%c1_i32, %2, %5] : memref<4x16x128xbf16, #tpu.memory_space<any>> -> memref<1x16x128xbf16, #tpu.memory_space<any>>
    %13 = tpu.memref_squeeze %12 : memref<1x16x128xbf16, #tpu.memory_space<any>> -> memref<16x128xbf16, #tpu.memory_space<any>>
    %c0_i32_6 = arith.constant 0 : i32
    %c0_i32_7 = arith.constant 0 : i32
    %14 = tpu.memref_slice %arg8[%c1_i32_4, %c0_i32_6, %c0_i32_7] : memref<4x16x128xbf16, #tpu.memory_space<vmem>> -> memref<1x16x128xbf16, #tpu.memory_space<vmem>>
    %15 = tpu.memref_squeeze %14 : memref<1x16x128xbf16, #tpu.memory_space<vmem>> -> memref<16x128xbf16, #tpu.memory_space<vmem>>
    %16 = tpu.memref_slice %arg9[%c1_i32_5] : memref<4x!tpu.dma_semaphore, #tpu.memory_space<semaphore_mem>> -> memref<1x!tpu.dma_semaphore, #tpu.memory_space<semaphore_mem>>
    %17 = tpu.memref_squeeze %16 : memref<1x!tpu.dma_semaphore, #tpu.memory_space<semaphore_mem>> -> memref<!tpu.dma_semaphore, #tpu.memory_space<semaphore_mem>>
    tpu.enqueue_dma source(%13 : memref<16x128xbf16, #tpu.memory_space<any>>) target(%15 : memref<16x128xbf16, #tpu.memory_space<vmem>>) target_semaphore(%17 : memref<!tpu.dma_semaphore, #tpu.memory_space<semaphore_mem>>)
    %c2_i32 = arith.constant 2 : i32
    %c2_i32_8 = arith.constant 2 : i32
    %c2_i32_9 = arith.constant 2 : i32
    %18 = tpu.memref_slice %arg6[%c2_i32, %2, %5] : memref<4x16x128xbf16, #tpu.memory_space<any>> -> memref<1x16x128xbf16, #tpu.memory_space<any>>
    %19 = tpu.memref_squeeze %18 : memref<1x16x128xbf16, #tpu.memory_space<any>> -> memref<16x128xbf16, #tpu.memory_space<any>>
    %c0_i32_10 = arith.constant 0 : i32
    %c0_i32_11 = arith.constant 0 : i32
    %20 = tpu.memref_slice %arg8[%c2_i32_8, %c0_i32_10, %c0_i32_11] : memref<4x16x128xbf16, #tpu.memory_space<vmem>> -> memref<1x16x128xbf16, #tpu.memory_space<vmem>>
    %21 = tpu.memref_squeeze %20 : memref<1x16x128xbf16, #tpu.memory_space<vmem>> -> memref<16x128xbf16, #tpu.memory_space<vmem>>
    %22 = tpu.memref_slice %arg9[%c2_i32_9] : memref<4x!tpu.dma_semaphore, #tpu.memory_space<semaphore_mem>> -> memref<1x!tpu.dma_semaphore, #tpu.memory_space<semaphore_mem>>
    %23 = tpu.memref_squeeze %22 : memref<1x!tpu.dma_semaphore, #tpu.memory_space<semaphore_mem>> -> memref<!tpu.dma_semaphore, #tpu.memory_space<semaphore_mem>>
    tpu.enqueue_dma source(%19 : memref<16x128xbf16, #tpu.memory_space<any>>) target(%21 : memref<16x128xbf16, #tpu.memory_space<vmem>>) target_semaphore(%23 : memref<!tpu.dma_semaphore, #tpu.memory_space<semaphore_mem>>)
    %c3_i32 = arith.constant 3 : i32
    %c3_i32_12 = arith.constant 3 : i32
    %c3_i32_13 = arith.constant 3 : i32
    %24 = tpu.memref_slice %arg6[%c3_i32, %2, %5] : memref<4x16x128xbf16, #tpu.memory_space<any>> -> memref<1x16x128xbf16, #tpu.memory_space<any>>
    %25 = tpu.memref_squeeze %24 : memref<1x16x128xbf16, #tpu.memory_space<any>> -> memref<16x128xbf16, #tpu.memory_space<any>>
    %c0_i32_14 = arith.constant 0 : i32
    %c0_i32_15 = arith.constant 0 : i32
    %26 = tpu.memref_slice %arg8[%c3_i32_12, %c0_i32_14, %c0_i32_15] : memref<4x16x128xbf16, #tpu.memory_space<vmem>> -> memref<1x16x128xbf16, #tpu.memory_space<vmem>>
    %27 = tpu.memref_squeeze %26 : memref<1x16x128xbf16, #tpu.memory_space<vmem>> -> memref<16x128xbf16, #tpu.memory_space<vmem>>
    %28 = tpu.memref_slice %arg9[%c3_i32_13] : memref<4x!tpu.dma_semaphore, #tpu.memory_space<semaphore_mem>> -> memref<1x!tpu.dma_semaphore, #tpu.memory_space<semaphore_mem>>
    %29 = tpu.memref_squeeze %28 : memref<1x!tpu.dma_semaphore, #tpu.memory_space<semaphore_mem>> -> memref<!tpu.dma_semaphore, #tpu.memory_space<semaphore_mem>>
    tpu.enqueue_dma source(%25 : memref<16x128xbf16, #tpu.memory_space<any>>) target(%27 : memref<16x128xbf16, #tpu.memory_space<vmem>>) target_semaphore(%29 : memref<!tpu.dma_semaphore, #tpu.memory_space<semaphore_mem>>)
    %c0 = arith.constant 0 : index
    %c0_16 = arith.constant 0 : index
    %30 = vector.load %arg4[%c0, %c0_16] : memref<32x16xbf16, #tpu.memory_space<vmem>>, vector<32x16xbf16>
    %c0_17 = arith.constant 0 : index
    %c0_18 = arith.constant 0 : index
    %31 = vector.load %arg5[%c0_17, %c0_18] : memref<128x128xbf16, #tpu.memory_space<vmem>>, vector<128x128xbf16>
    %c0_i32_19 = arith.constant 0 : i32
    %c0_i32_20 = arith.constant 0 : i32
    %c0_i32_21 = arith.constant 0 : i32
    %32 = tpu.memref_slice %arg6[%c0_i32_19, %2, %5] : memref<4x16x128xbf16, #tpu.memory_space<any>> -> memref<1x16x128xbf16, #tpu.memory_space<any>>
    %33 = tpu.memref_squeeze %32 : memref<1x16x128xbf16, #tpu.memory_space<any>> -> memref<16x128xbf16, #tpu.memory_space<any>>
    %c0_i32_22 = arith.constant 0 : i32
    %c0_i32_23 = arith.constant 0 : i32
    %34 = tpu.memref_slice %arg8[%c0_i32_20, %c0_i32_22, %c0_i32_23] : memref<4x16x128xbf16, #tpu.memory_space<vmem>> -> memref<1x16x128xbf16, #tpu.memory_space<vmem>>
    %35 = tpu.memref_squeeze %34 : memref<1x16x128xbf16, #tpu.memory_space<vmem>> -> memref<16x128xbf16, #tpu.memory_space<vmem>>
    %36 = tpu.memref_slice %arg9[%c0_i32_21] : memref<4x!tpu.dma_semaphore, #tpu.memory_space<semaphore_mem>> -> memref<1x!tpu.dma_semaphore, #tpu.memory_space<semaphore_mem>>
    %37 = tpu.memref_squeeze %36 : memref<1x!tpu.dma_semaphore, #tpu.memory_space<semaphore_mem>> -> memref<!tpu.dma_semaphore, #tpu.memory_space<semaphore_mem>>
    tpu.wait_dma2 semaphore(%37 : memref<!tpu.dma_semaphore, #tpu.memory_space<semaphore_mem>>) src(%33 : memref<16x128xbf16, #tpu.memory_space<any>>) dst(%35 : memref<16x128xbf16, #tpu.memory_space<vmem>>)
    %c0_24 = arith.constant 0 : index
    %c0_25 = arith.constant 0 : index
    %c0_26 = arith.constant 0 : index
    %38 = vector.load %arg8[%c0_24, %c0_25, %c0_26] : memref<4x16x128xbf16, #tpu.memory_space<vmem>>, vector<1x16x128xbf16>
    %39 = vector.shape_cast %38 : vector<1x16x128xbf16> to vector<16x128xbf16>
    %cst = arith.constant dense<0.000000e+00> : vector<16x128xf32>
    %40 = tpu.matmul %39, %31, %cst {dimension_numbers = #tpu.dot_dimension_numbers<[1], [0], [0], [1], [0, 0, 1, 1], [], []>} : vector<16x128xbf16>, vector<128x128xbf16>, vector<16x128xf32> -> vector<16x128xf32>
    %41 = arith.truncf %40 : vector<16x128xf32> to vector<16x128xbf16>
    %cst_27 = arith.constant dense<0.000000e+00> : vector<32x128xf32>
    %42 = tpu.matmul %30, %41, %cst_27 {dimension_numbers = #tpu.dot_dimension_numbers<[1], [0], [0], [1], [0, 0, 1, 1], [], []>} : vector<32x16xbf16>, vector<16x128xbf16>, vector<32x128xf32> -> vector<32x128xf32>
    %c0_28 = arith.constant 0 : index
    %c0_29 = arith.constant 0 : index
    %c0_30 = arith.constant 0 : index
    %43 = vector.load %arg7[%c0_28, %c0_29, %c0_30] : memref<4x32x128xf32, #tpu.memory_space<vmem>>, vector<1x32x128xf32>
    %44 = vector.shape_cast %43 : vector<1x32x128xf32> to vector<32x128xf32>
    %45 = vector.shape_cast %42 : vector<32x128xf32> to vector<1x32x128xf32>
    tpu.vector_store %arg7[%c0_28, %c0_29, %c0_30], %45 {strides = array<i32>} : memref<4x32x128xf32, #tpu.memory_space<vmem>>, vector<1x32x128xf32>,
    %c1_i32_31 = arith.constant 1 : i32
    %c1_i32_32 = arith.constant 1 : i32
    %c1_i32_33 = arith.constant 1 : i32
    %46 = tpu.memref_slice %arg6[%c1_i32_31, %2, %5] : memref<4x16x128xbf16, #tpu.memory_space<any>> -> memref<1x16x128xbf16, #tpu.memory_space<any>>
    %47 = tpu.memref_squeeze %46 : memref<1x16x128xbf16, #tpu.memory_space<any>> -> memref<16x128xbf16, #tpu.memory_space<any>>
    %c0_i32_34 = arith.constant 0 : i32
    %c0_i32_35 = arith.constant 0 : i32
    %48 = tpu.memref_slice %arg8[%c1_i32_32, %c0_i32_34, %c0_i32_35] : memref<4x16x128xbf16, #tpu.memory_space<vmem>> -> memref<1x16x128xbf16, #tpu.memory_space<vmem>>
    %49 = tpu.memref_squeeze %48 : memref<1x16x128xbf16, #tpu.memory_space<vmem>> -> memref<16x128xbf16, #tpu.memory_space<vmem>>
    %50 = tpu.memref_slice %arg9[%c1_i32_33] : memref<4x!tpu.dma_semaphore, #tpu.memory_space<semaphore_mem>> -> memref<1x!tpu.dma_semaphore, #tpu.memory_space<semaphore_mem>>
    %51 = tpu.memref_squeeze %50 : memref<1x!tpu.dma_semaphore, #tpu.memory_space<semaphore_mem>> -> memref<!tpu.dma_semaphore, #tpu.memory_space<semaphore_mem>>
    tpu.wait_dma2 semaphore(%51 : memref<!tpu.dma_semaphore, #tpu.memory_space<semaphore_mem>>) src(%47 : memref<16x128xbf16, #tpu.memory_space<any>>) dst(%49 : memref<16x128xbf16, #tpu.memory_space<vmem>>)
    %c1 = arith.constant 1 : index
    %c0_36 = arith.constant 0 : index
    %c0_37 = arith.constant 0 : index
    %52 = vector.load %arg8[%c1, %c0_36, %c0_37] : memref<4x16x128xbf16, #tpu.memory_space<vmem>>, vector<1x16x128xbf16>
    %53 = vector.shape_cast %52 : vector<1x16x128xbf16> to vector<16x128xbf16>
    %cst_38 = arith.constant dense<0.000000e+00> : vector<16x128xf32>
    %54 = tpu.matmul %53, %31, %cst_38 {dimension_numbers = #tpu.dot_dimension_numbers<[1], [0], [0], [1], [0, 0, 1, 1], [], []>} : vector<16x128xbf16>, vector<128x128xbf16>, vector<16x128xf32> -> vector<16x128xf32>
    %55 = arith.truncf %54 : vector<16x128xf32> to vector<16x128xbf16>
    %cst_39 = arith.constant dense<0.000000e+00> : vector<32x128xf32>
    %56 = tpu.matmul %30, %55, %cst_39 {dimension_numbers = #tpu.dot_dimension_numbers<[1], [0], [0], [1], [0, 0, 1, 1], [], []>} : vector<32x16xbf16>, vector<16x128xbf16>, vector<32x128xf32> -> vector<32x128xf32>
    %c1_40 = arith.constant 1 : index
    %c0_41 = arith.constant 0 : index
    %c0_42 = arith.constant 0 : index
    %57 = vector.load %arg7[%c1_40, %c0_41, %c0_42] : memref<4x32x128xf32, #tpu.memory_space<vmem>>, vector<1x32x128xf32>
    %58 = vector.shape_cast %57 : vector<1x32x128xf32> to vector<32x128xf32>
    %59 = vector.shape_cast %56 : vector<32x128xf32> to vector<1x32x128xf32>
    tpu.vector_store %arg7[%c1_40, %c0_41, %c0_42], %59 {strides = array<i32>} : memref<4x32x128xf32, #tpu.memory_space<vmem>>, vector<1x32x128xf32>,
    %c2_i32_43 = arith.constant 2 : i32
    %c2_i32_44 = arith.constant 2 : i32
    %c2_i32_45 = arith.constant 2 : i32
    %60 = tpu.memref_slice %arg6[%c2_i32_43, %2, %5] : memref<4x16x128xbf16, #tpu.memory_space<any>> -> memref<1x16x128xbf16, #tpu.memory_space<any>>
    %61 = tpu.memref_squeeze %60 : memref<1x16x128xbf16, #tpu.memory_space<any>> -> memref<16x128xbf16, #tpu.memory_space<any>>
    %c0_i32_46 = arith.constant 0 : i32
    %c0_i32_47 = arith.constant 0 : i32
    %62 = tpu.memref_slice %arg8[%c2_i32_44, %c0_i32_46, %c0_i32_47] : memref<4x16x128xbf16, #tpu.memory_space<vmem>> -> memref<1x16x128xbf16, #tpu.memory_space<vmem>>
    %63 = tpu.memref_squeeze %62 : memref<1x16x128xbf16, #tpu.memory_space<vmem>> -> memref<16x128xbf16, #tpu.memory_space<vmem>>
    %64 = tpu.memref_slice %arg9[%c2_i32_45] : memref<4x!tpu.dma_semaphore, #tpu.memory_space<semaphore_mem>> -> memref<1x!tpu.dma_semaphore, #tpu.memory_space<semaphore_mem>>
    %65 = tpu.memref_squeeze %64 : memref<1x!tpu.dma_semaphore, #tpu.memory_space<semaphore_mem>> -> memref<!tpu.dma_semaphore, #tpu.memory_space<semaphore_mem>>
    tpu.wait_dma2 semaphore(%65 : memref<!tpu.dma_semaphore, #tpu.memory_space<semaphore_mem>>) src(%61 : memref<16x128xbf16, #tpu.memory_space<any>>) dst(%63 : memref<16x128xbf16, #tpu.memory_space<vmem>>)
    %c2 = arith.constant 2 : index
    %c0_48 = arith.constant 0 : index
    %c0_49 = arith.constant 0 : index
    %66 = vector.load %arg8[%c2, %c0_48, %c0_49] : memref<4x16x128xbf16, #tpu.memory_space<vmem>>, vector<1x16x128xbf16>
    %67 = vector.shape_cast %66 : vector<1x16x128xbf16> to vector<16x128xbf16>
    %cst_50 = arith.constant dense<0.000000e+00> : vector<16x128xf32>
    %68 = tpu.matmul %67, %31, %cst_50 {dimension_numbers = #tpu.dot_dimension_numbers<[1], [0], [0], [1], [0, 0, 1, 1], [], []>} : vector<16x128xbf16>, vector<128x128xbf16>, vector<16x128xf32> -> vector<16x128xf32>
    %69 = arith.truncf %68 : vector<16x128xf32> to vector<16x128xbf16>
    %cst_51 = arith.constant dense<0.000000e+00> : vector<32x128xf32>
    %70 = tpu.matmul %30, %69, %cst_51 {dimension_numbers = #tpu.dot_dimension_numbers<[1], [0], [0], [1], [0, 0, 1, 1], [], []>} : vector<32x16xbf16>, vector<16x128xbf16>, vector<32x128xf32> -> vector<32x128xf32>
    %c2_52 = arith.constant 2 : index
    %c0_53 = arith.constant 0 : index
    %c0_54 = arith.constant 0 : index
    %71 = vector.load %arg7[%c2_52, %c0_53, %c0_54] : memref<4x32x128xf32, #tpu.memory_space<vmem>>, vector<1x32x128xf32>
    %72 = vector.shape_cast %71 : vector<1x32x128xf32> to vector<32x128xf32>
    %73 = vector.shape_cast %70 : vector<32x128xf32> to vector<1x32x128xf32>
    tpu.vector_store %arg7[%c2_52, %c0_53, %c0_54], %73 {strides = array<i32>} : memref<4x32x128xf32, #tpu.memory_space<vmem>>, vector<1x32x128xf32>,
    %c3_i32_55 = arith.constant 3 : i32
    %c3_i32_56 = arith.constant 3 : i32
    %c3_i32_57 = arith.constant 3 : i32
    %74 = tpu.memref_slice %arg6[%c3_i32_55, %2, %5] : memref<4x16x128xbf16, #tpu.memory_space<any>> -> memref<1x16x128xbf16, #tpu.memory_space<any>>
    %75 = tpu.memref_squeeze %74 : memref<1x16x128xbf16, #tpu.memory_space<any>> -> memref<16x128xbf16, #tpu.memory_space<any>>
    %c0_i32_58 = arith.constant 0 : i32
    %c0_i32_59 = arith.constant 0 : i32
    %76 = tpu.memref_slice %arg8[%c3_i32_56, %c0_i32_58, %c0_i32_59] : memref<4x16x128xbf16, #tpu.memory_space<vmem>> -> memref<1x16x128xbf16, #tpu.memory_space<vmem>>
    %77 = tpu.memref_squeeze %76 : memref<1x16x128xbf16, #tpu.memory_space<vmem>> -> memref<16x128xbf16, #tpu.memory_space<vmem>>
    %78 = tpu.memref_slice %arg9[%c3_i32_57] : memref<4x!tpu.dma_semaphore, #tpu.memory_space<semaphore_mem>> -> memref<1x!tpu.dma_semaphore, #tpu.memory_space<semaphore_mem>>
    %79 = tpu.memref_squeeze %78 : memref<1x!tpu.dma_semaphore, #tpu.memory_space<semaphore_mem>> -> memref<!tpu.dma_semaphore, #tpu.memory_space<semaphore_mem>>
    tpu.wait_dma2 semaphore(%79 : memref<!tpu.dma_semaphore, #tpu.memory_space<semaphore_mem>>) src(%75 : memref<16x128xbf16, #tpu.memory_space<any>>) dst(%77 : memref<16x128xbf16, #tpu.memory_space<vmem>>)
    %c3 = arith.constant 3 : index
    %c0_60 = arith.constant 0 : index
    %c0_61 = arith.constant 0 : index
    %80 = vector.load %arg8[%c3, %c0_60, %c0_61] : memref<4x16x128xbf16, #tpu.memory_space<vmem>>, vector<1x16x128xbf16>
    %81 = vector.shape_cast %80 : vector<1x16x128xbf16> to vector<16x128xbf16>
    %cst_62 = arith.constant dense<0.000000e+00> : vector<16x128xf32>
    %82 = tpu.matmul %81, %31, %cst_62 {dimension_numbers = #tpu.dot_dimension_numbers<[1], [0], [0], [1], [0, 0, 1, 1], [], []>} : vector<16x128xbf16>, vector<128x128xbf16>, vector<16x128xf32> -> vector<16x128xf32>
    %83 = arith.truncf %82 : vector<16x128xf32> to vector<16x128xbf16>
    %cst_63 = arith.constant dense<0.000000e+00> : vector<32x128xf32>
    %84 = tpu.matmul %30, %83, %cst_63 {dimension_numbers = #tpu.dot_dimension_numbers<[1], [0], [0], [1], [0, 0, 1, 1], [], []>} : vector<32x16xbf16>, vector<16x128xbf16>, vector<32x128xf32> -> vector<32x128xf32>
    %c3_64 = arith.constant 3 : index
    %c0_65 = arith.constant 0 : index
    %c0_66 = arith.constant 0 : index
    %85 = vector.load %arg7[%c3_64, %c0_65, %c0_66] : memref<4x32x128xf32, #tpu.memory_space<vmem>>, vector<1x32x128xf32>
    %86 = vector.shape_cast %85 : vector<1x32x128xf32> to vector<32x128xf32>
    %87 = vector.shape_cast %84 : vector<32x128xf32> to vector<1x32x128xf32>
    tpu.vector_store %arg7[%c3_64, %c0_65, %c0_66], %87 {strides = array<i32>} : memref<4x32x128xf32, #tpu.memory_space<vmem>>, vector<1x32x128xf32>,
    return
  }
  func.func @transform_0(%arg0: i32, %arg1: i32, %arg2: memref<1xi32, #tpu.memory_space<smem>>, %arg3: memref<1xi32, #tpu.memory_space<smem>>) -> (i32, i32) {
    %c0_i32 = arith.constant 0 : i32
    %c0_i32_0 = arith.constant 0 : i32
    return %arg0, %c0_i32 : i32, i32
  }
  func.func @transform_1(%arg0: i32, %arg1: i32, %arg2: memref<1xi32, #tpu.memory_space<smem>>, %arg3: memref<1xi32, #tpu.memory_space<smem>>) -> (i32, i32) {
    %c0_i32 = arith.constant 0 : i32
    %c0_i32_0 = arith.constant 0 : i32
    return %c0_i32, %arg1 : i32, i32
  }
  func.func @transform_3(%arg0: i32, %arg1: i32, %arg2: memref<1xi32, #tpu.memory_space<smem>>, %arg3: memref<1xi32, #tpu.memory_space<smem>>) -> (i32, i32, i32) {
    %c0_i32 = arith.constant 0 : i32
    %c0_i32_0 = arith.constant 0 : i32
    return %c0_i32, %arg0, %arg1 : i32, i32, i32
  }
}

</mosaic_0001>

<llo_original>
// kernel: _apply.1
$region0: #{_apply.1}
  #allocation0 [shape = 'u32[]', space=smem, size = 0x4, offset = 0x4, fixed_abs, tag = 'smem constant byte address 0x4 - core index']
  #allocation1 [shape = 'u32[144,128]{1,0:T(1,128)}', space=vmem, size = 0x12000, scoped, tag = 'internal scratch']
  #allocation2 [shape = 'bf16[4,16,128]{2,1,0:T(16,128)(2,1)}', space=vmem, size = 0x4000, scoped, tag = 'scratch operand']
  #allocation3 [shape = 's32[4]{0}', space=sflag, size = 0x10, scoped, tag = 'scratch operand']
  #allocation4 [shape = 's32[1]{0}', space=sflag, size = 0x4, scoped, tag = 'scoped memory for _apply.1']
  #allocation5 [shape = 's32[1]{0:T(128)S(6)}', space=smem, size = 0x200, scoped, tag = 'prefetched SMEM operand 0']
  #allocation6 [shape = 's32[1]{0:T(128)S(6)}', space=smem, size = 0x200, scoped, tag = 'prefetched SMEM operand 1']
  #allocation8 [shape = 's32[]', space=sflag, size = 0x4, offset = 0, fixed_abs, tag = 'sflag constant byte address 0x0 - dummy sync flag']
  #allocation9 [shape = 's32[]', space=sflag, size = 0x4, offset = 0, fixed_abs, tag = 'sflag constant byte address 0x0 - dummy sync flag']
  #allocation10 [shape = 's32[]', space=sflag, size = 0x4, offset = 0, fixed_abs, tag = 'sflag constant byte address 0x0 - dummy sync flag']
  #allocation11 [shape = 's32[]', space=sflag, size = 0x4, offset = 0, fixed_abs, tag = 'sflag constant byte address 0x0 - dummy sync flag']
  %s0 = inlined_call_operand.<no memory space> [shape: s32[1], index: 0, kind: input, shape index: {}]
  %s1 = inlined_call_operand.<no memory space> [shape: s32[1], index: 1, kind: input, shape index: {}]
  %s2 = inlined_call_operand.vmem [shape: bf16[32,16], index: 2, kind: input, shape index: {}]
  %s3 = inlined_call_operand.vmem [shape: bf16[128,128], index: 3, kind: input, shape index: {}]
  %s4 = inlined_call_operand.vmem [shape: bf16[4,16,128], index: 4, kind: input, shape index: {}]
  %s5 = inlined_call_operand.vmem [shape: f32[4,23,23], index: 5, kind: output, shape index: {}]
  %s6 = sld [smem:[#allocation0]]
  $region188: #{_apply.1} parent=0
    _
  %s8 = ssub.s32 1, %s6
  %s9 = scalar_select 0, %s8, %s6
  %10 = sst [smem:[#allocation5]] %s0
  %11 = sst [smem:[#allocation6]] %s1
  $region1: #{_apply.1} parent=0
    #allocation7 [shape = 'u8[65536]{0}', space=vmem, size = 0x10000, scoped, tag = 'output window, operand 0, single buffered']
    // Predicated region
    $region2: #{_apply.1} parent=1 // pred_check
      _
    $region3: #{_apply.1} parent=1 // pred_check_branch
      %13 = sbr.rel (0) target = $region5
    $region4: #{_apply.1} parent=1 // pred_region
      _
    $region5: #{_apply.1} parent=1 // pred_fallthru
      _
    // Predicated region
    $region6: #{_apply.1} parent=1 // pred_check
      _
    $region7: #{_apply.1} parent=1 // pred_check_branch
      %15 = sbr.rel (0) target = $region9
    $region8: #{_apply.1} parent=1 // pred_region
      _
    $region9: #{_apply.1} parent=1 // pred_fallthru
      _
    %s17 = sld [smem:[#allocation5]]
    %s18 = sld [smem:[#allocation6]]
    %s19 = sshra.s32 %s18, 7
    %s20 = sand.u32 %s18, 127
    %s21 = sshra.s32 %s17, 3
    %s22 = sand.u32 %s17, 7
    %s23 = sadd.s32 %s19, %s21
    %s24 = smul.addr %s23, 4
    %s25 = scalar_lea.vmem %s4, %s24
    %p27 = scmp.lt.u32.totalorder 8, 8
    %p28 = pneg %p27
    // Predicated region
    $region10: #{_apply.1} parent=1 // pred_check
      _
    $region11: #{_apply.1} parent=1 // pred_check_branch
      %30 = sbr.rel (%p27) target = $region13
    $region12: #{_apply.1} parent=1 // pred_region
      %s45 = sand.u32 8, 7
      %p46 = scmp.eq.s32.totalorder %s45, 0
      // Predicated region
      $region25: #{_apply.1} parent=12 // pred_check
        %p47 = pneg %p46
      $region26: #{_apply.1} parent=12 // pred_check_branch
        %49 = sbr.rel (%p47) target = $region28
      $region27: #{_apply.1} parent=12 // pred_region
        loop: start=0, step=1, limit=1
        $region29: #{_apply.1} parent=27 // loop_pre_header
          _
        $region30: #{_apply.1} parent=27 // loop_header
          %s51 = sphi 0, %s55
          %p52 = scmp.ge.s32.totalorder %s51, 1
          %s56 = sphi %s25, %s25
          %s57 = sphi [#allocation2], [#allocation2]
        $region31: #{_apply.1} parent=27 // loop_header_branch
          %54 = sbr.rel (%p52) target = $region35
        $region32: #{_apply.1} parent=27 // loop_body
          %v58 = vld [vmem:[%s56] sm:$0xff]
          %59 = vst [vmem:[%s57] sm:$0xff] %v58
        $region33: #{_apply.1} parent=27 // loop_footer
          %s55 = sadd.s32 1, %s51
        $region34: #{_apply.1} parent=27 // loop_footer_branch
          %50 = sbr.rel target = $region30
        $region35: #{_apply.1} parent=27 // loop_exit
          _
      $region28: #{_apply.1} parent=12 // pred_fallthru
        _
      %p60 = pneg %p46
      // Predicated region
      $region36: #{_apply.1} parent=12 // pred_check
        _
      $region37: #{_apply.1} parent=12 // pred_check_branch
        %62 = sbr.rel (%p46) target = $region39
      $region38: #{_apply.1} parent=12 // pred_region
        %s63 = sand.u32 8, 7
      $region39: #{_apply.1} parent=12 // pred_fallthru
        _
    $region13: #{_apply.1} parent=1 // pred_fallthru
      _
    // Predicated region
    $region14: #{_apply.1} parent=1 // pred_check
      %p31 = pneg %p27
    $region15: #{_apply.1} parent=1 // pred_check_branch
      %33 = sbr.rel (%p31) target = $region17
    $region16: #{_apply.1} parent=1 // pred_region
      %s34 = sshllo.u32 0, 8
      loop: start=0, step=1, limit=1
      $region18: #{_apply.1} parent=16 // loop_pre_header
        _
      $region19: #{_apply.1} parent=16 // loop_header
        %s36 = sphi 0, %s40
        %p37 = scmp.ge.s32.totalorder %s36, 1
        %s41 = sphi %s25, %s25
        %s42 = sphi [#allocation2], [#allocation2]
      $region20: #{_apply.1} parent=16 // loop_header_branch
        %39 = sbr.rel (%p37) target = $region24
      $region21: #{_apply.1} parent=16 // loop_body
        %v43 = vld [vmem:[%s41] sm:%s34]
        %44 = vst [vmem:[%s42] sm:%s34] %v43
      $region22: #{_apply.1} parent=16 // loop_footer
        %s40 = sadd.s32 1, %s36
      $region23: #{_apply.1} parent=16 // loop_footer_branch
        %35 = sbr.rel target = $region19
      $region24: #{_apply.1} parent=16 // loop_exit
        _
    $region17: #{_apply.1} parent=1 // pred_fallthru
      _
    // Predicated region
    $region40: #{_apply.1} parent=1 // pred_check
      _
    $region41: #{_apply.1} parent=1 // pred_check_branch
      %66 = sbr.rel (0) target = $region43
    $region42: #{_apply.1} parent=1 // pred_region
      %67 = vsyncadd [#allocation3], 128
    $region43: #{_apply.1} parent=1 // pred_fallthru
      _
    %s68 = sadd.s32 %s23, 2
    %s69 = smul.addr %s68, 4
    %s70 = scalar_lea.vmem %s4, %s69
    %s71 = scalar_lea.vmem [#allocation2], 8
    %s72 = scalar_lea.sflag [#allocation3], 1
    %p74 = scmp.lt.u32.totalorder 8, 8
    %p75 = pneg %p74
    // Predicated region
    $region44: #{_apply.1} parent=1 // pred_check
      _
    $region45: #{_apply.1} parent=1 // pred_check_branch
      %77 = sbr.rel (%p74) target = $region47
    $region46: #{_apply.1} parent=1 // pred_region
      %s92 = sand.u32 8, 7
      %p93 = scmp.eq.s32.totalorder %s92, 0
      // Predicated region
      $region59: #{_apply.1} parent=46 // pred_check
        %p94 = pneg %p93
      $region60: #{_apply.1} parent=46 // pred_check_branch
        %96 = sbr.rel (%p94) target = $region62
      $region61: #{_apply.1} parent=46 // pred_region
        loop: start=0, step=1, limit=1
        $region63: #{_apply.1} parent=61 // loop_pre_header
          _
        $region64: #{_apply.1} parent=61 // loop_header
          %s98 = sphi 0, %s102
          %p99 = scmp.ge.s32.totalorder %s98, 1
          %s103 = sphi %s70, %s70
          %s104 = sphi %s71, %s71
        $region65: #{_apply.1} parent=61 // loop_header_branch
          %101 = sbr.rel (%p99) target = $region69
        $region66: #{_apply.1} parent=61 // loop_body
          %v105 = vld [vmem:[%s103] sm:$0xff]
          %106 = vst [vmem:[%s104] sm:$0xff] %v105
        $region67: #{_apply.1} parent=61 // loop_footer
          %s102 = sadd.s32 1, %s98
        $region68: #{_apply.1} parent=61 // loop_footer_branch
          %97 = sbr.rel target = $region64
        $region69: #{_apply.1} parent=61 // loop_exit
          _
      $region62: #{_apply.1} parent=46 // pred_fallthru
        _
      %p107 = pneg %p93
      // Predicated region
      $region70: #{_apply.1} parent=46 // pred_check
        _
      $region71: #{_apply.1} parent=46 // pred_check_branch
        %109 = sbr.rel (%p93) target = $region73
      $region72: #{_apply.1} parent=46 // pred_region
        %s110 = sand.u32 8, 7
      $region73: #{_apply.1} parent=46 // pred_fallthru
        _
    $region47: #{_apply.1} parent=1 // pred_fallthru
      _
    // Predicated region
    $region48: #{_apply.1} parent=1 // pred_check
      %p78 = pneg %p74
    $region49: #{_apply.1} parent=1 // pred_check_branch
      %80 = sbr.rel (%p78) target = $region51
    $region50: #{_apply.1} parent=1 // pred_region
      %s81 = sshllo.u32 0, 8
      loop: start=0, step=1, limit=1
      $region52: #{_apply.1} parent=50 // loop_pre_header
        _
      $region53: #{_apply.1} parent=50 // loop_header
        %s83 = sphi 0, %s87
        %p84 = scmp.ge.s32.totalorder %s83, 1
        %s88 = sphi %s70, %s70
        %s89 = sphi %s71, %s71
      $region54: #{_apply.1} parent=50 // loop_header_branch
        %86 = sbr.rel (%p84) target = $region58
      $region55: #{_apply.1} parent=50 // loop_body
        %v90 = vld [vmem:[%s88] sm:%s81]
        %91 = vst [vmem:[%s89] sm:%s81] %v90
      $region56: #{_apply.1} parent=50 // loop_footer
        %s87 = sadd.s32 1, %s83
      $region57: #{_apply.1} parent=50 // loop_footer_branch
        %82 = sbr.rel target = $region53
      $region58: #{_apply.1} parent=50 // loop_exit
        _
    $region51: #{_apply.1} parent=1 // pred_fallthru
      _
    // Predicated region
    $region74: #{_apply.1} parent=1 // pred_check
      _
    $region75: #{_apply.1} parent=1 // pred_check_branch
      %113 = sbr.rel (0) target = $region77
    $region76: #{_apply.1} parent=1 // pred_region
      %114 = vsyncadd %s72, 128
    $region77: #{_apply.1} parent=1 // pred_fallthru
      _
    %s115 = sadd.s32 %s23, 4
    %s116 = smul.addr %s115, 4
    %s117 = scalar_lea.vmem %s4, %s116
    %s118 = scalar_lea.vmem [#allocation2], 16
    %s119 = scalar_lea.sflag [#allocation3], 2
    %p121 = scmp.lt.u32.totalorder 8, 8
    %p122 = pneg %p121
    // Predicated region
    $region78: #{_apply.1} parent=1 // pred_check
      _
    $region79: #{_apply.1} parent=1 // pred_check_branch
      %124 = sbr.rel (%p121) target = $region81
    $region80: #{_apply.1} parent=1 // pred_region
      %s139 = sand.u32 8, 7
      %p140 = scmp.eq.s32.totalorder %s139, 0
      // Predicated region
      $region93: #{_apply.1} parent=80 // pred_check
        %p141 = pneg %p140
      $region94: #{_apply.1} parent=80 // pred_check_branch
        %143 = sbr.rel (%p141) target = $region96
      $region95: #{_apply.1} parent=80 // pred_region
        loop: start=0, step=1, limit=1
        $region97: #{_apply.1} parent=95 // loop_pre_header
          _
        $region98: #{_apply.1} parent=95 // loop_header
          %s145 = sphi 0, %s149
          %p146 = scmp.ge.s32.totalorder %s145, 1
          %s150 = sphi %s117, %s117
          %s151 = sphi %s118, %s118
        $region99: #{_apply.1} parent=95 // loop_header_branch
          %148 = sbr.rel (%p146) target = $region103
        $region100: #{_apply.1} parent=95 // loop_body
          %v152 = vld [vmem:[%s150] sm:$0xff]
          %153 = vst [vmem:[%s151] sm:$0xff] %v152
        $region101: #{_apply.1} parent=95 // loop_footer
          %s149 = sadd.s32 1, %s145
        $region102: #{_apply.1} parent=95 // loop_footer_branch
          %144 = sbr.rel target = $region98
        $region103: #{_apply.1} parent=95 // loop_exit
          _
      $region96: #{_apply.1} parent=80 // pred_fallthru
        _
      %p154 = pneg %p140
      // Predicated region
      $region104: #{_apply.1} parent=80 // pred_check
        _
      $region105: #{_apply.1} parent=80 // pred_check_branch
        %156 = sbr.rel (%p140) target = $region107
      $region106: #{_apply.1} parent=80 // pred_region
        %s157 = sand.u32 8, 7
      $region107: #{_apply.1} parent=80 // pred_fallthru
        _
    $region81: #{_apply.1} parent=1 // pred_fallthru
      _
    // Predicated region
    $region82: #{_apply.1} parent=1 // pred_check
      %p125 = pneg %p121
    $region83: #{_apply.1} parent=1 // pred_check_branch
      %127 = sbr.rel (%p125) target = $region85
    $region84: #{_apply.1} parent=1 // pred_region
      %s128 = sshllo.u32 0, 8
      loop: start=0, step=1, limit=1
      $region86: #{_apply.1} parent=84 // loop_pre_header
        _
      $region87: #{_apply.1} parent=84 // loop_header
        %s130 = sphi 0, %s134
        %p131 = scmp.ge.s32.totalorder %s130, 1
        %s135 = sphi %s117, %s117
        %s136 = sphi %s118, %s118
      $region88: #{_apply.1} parent=84 // loop_header_branch
        %133 = sbr.rel (%p131) target = $region92
      $region89: #{_apply.1} parent=84 // loop_body
        %v137 = vld [vmem:[%s135] sm:%s128]
        %138 = vst [vmem:[%s136] sm:%s128] %v137
      $region90: #{_apply.1} parent=84 // loop_footer
        %s134 = sadd.s32 1, %s130
      $region91: #{_apply.1} parent=84 // loop_footer_branch
        %129 = sbr.rel target = $region87
      $region92: #{_apply.1} parent=84 // loop_exit
        _
    $region85: #{_apply.1} parent=1 // pred_fallthru
      _
    // Predicated region
    $region108: #{_apply.1} parent=1 // pred_check
      _
    $region109: #{_apply.1} parent=1 // pred_check_branch
      %160 = sbr.rel (0) target = $region111
    $region110: #{_apply.1} parent=1 // pred_region
      %161 = vsyncadd %s119, 128
    $region111: #{_apply.1} parent=1 // pred_fallthru
      _
    %s162 = sadd.s32 %s23, 6
    %s163 = smul.addr %s162, 4
    %s164 = scalar_lea.vmem %s4, %s163
    %s165 = scalar_lea.vmem [#allocation2], 24
    %s166 = scalar_lea.sflag [#allocation3], 3
    %p168 = scmp.lt.u32.totalorder 8, 8
    %p169 = pneg %p168
    // Predicated region
    $region112: #{_apply.1} parent=1 // pred_check
      _
    $region113: #{_apply.1} parent=1 // pred_check_branch
      %171 = sbr.rel (%p168) target = $region115
    $region114: #{_apply.1} parent=1 // pred_region
      %s186 = sand.u32 8, 7
      %p187 = scmp.eq.s32.totalorder %s186, 0
      // Predicated region
      $region127: #{_apply.1} parent=114 // pred_check
        %p188 = pneg %p187
      $region128: #{_apply.1} parent=114 // pred_check_branch
        %190 = sbr.rel (%p188) target = $region130
      $region129: #{_apply.1} parent=114 // pred_region
        loop: start=0, step=1, limit=1
        $region131: #{_apply.1} parent=129 // loop_pre_header
          _
        $region132: #{_apply.1} parent=129 // loop_header
          %s192 = sphi 0, %s196
          %p193 = scmp.ge.s32.totalorder %s192, 1
          %s197 = sphi %s164, %s164
          %s198 = sphi %s165, %s165
        $region133: #{_apply.1} parent=129 // loop_header_branch
          %195 = sbr.rel (%p193) target = $region137
        $region134: #{_apply.1} parent=129 // loop_body
          %v199 = vld [vmem:[%s197] sm:$0xff]
          %200 = vst [vmem:[%s198] sm:$0xff] %v199
        $region135: #{_apply.1} parent=129 // loop_footer
          %s196 = sadd.s32 1, %s192
        $region136: #{_apply.1} parent=129 // loop_footer_branch
          %191 = sbr.rel target = $region132
        $region137: #{_apply.1} parent=129 // loop_exit
          _
      $region130: #{_apply.1} parent=114 // pred_fallthru
        _
      %p201 = pneg %p187
      // Predicated region
      $region138: #{_apply.1} parent=114 // pred_check
        _
      $region139: #{_apply.1} parent=114 // pred_check_branch
        %203 = sbr.rel (%p187) target = $region141
      $region140: #{_apply.1} parent=114 // pred_region
        %s204 = sand.u32 8, 7
      $region141: #{_apply.1} parent=114 // pred_fallthru
        _
    $region115: #{_apply.1} parent=1 // pred_fallthru
      _
    // Predicated region
    $region116: #{_apply.1} parent=1 // pred_check
      %p172 = pneg %p168
    $region117: #{_apply.1} parent=1 // pred_check_branch
      %174 = sbr.rel (%p172) target = $region119
    $region118: #{_apply.1} parent=1 // pred_region
      %s175 = sshllo.u32 0, 8
      loop: start=0, step=1, limit=1
      $region120: #{_apply.1} parent=118 // loop_pre_header
        _
      $region121: #{_apply.1} parent=118 // loop_header
        %s177 = sphi 0, %s181
        %p178 = scmp.ge.s32.totalorder %s177, 1
        %s182 = sphi %s164, %s164
        %s183 = sphi %s165, %s165
      $region122: #{_apply.1} parent=118 // loop_header_branch
        %180 = sbr.rel (%p178) target = $region126
      $region123: #{_apply.1} parent=118 // loop_body
        %v184 = vld [vmem:[%s182] sm:%s175]
        %185 = vst [vmem:[%s183] sm:%s175] %v184
      $region124: #{_apply.1} parent=118 // loop_footer
        %s181 = sadd.s32 1, %s177
      $region125: #{_apply.1} parent=118 // loop_footer_branch
        %176 = sbr.rel target = $region121
      $region126: #{_apply.1} parent=118 // loop_exit
        _
    $region119: #{_apply.1} parent=1 // pred_fallthru
      _
    // Predicated region
    $region142: #{_apply.1} parent=1 // pred_check
      _
    $region143: #{_apply.1} parent=1 // pred_check_branch
      %207 = sbr.rel (0) target = $region145
    $region144: #{_apply.1} parent=1 // pred_region
      %208 = vsyncadd %s166, 128
    $region145: #{_apply.1} parent=1 // pred_fallthru
      _
    %v209 = vld [vmem:[%s2] sm:$0xf]
    %v210 = vld [vmem:[%s2 + $0x4] sm:$0xf]
    %v211 = vld [vmem:[%s2 + $0x8] sm:$0xf]
    %v212 = vld [vmem:[%s2 + $0xc] sm:$0xf]
    %v213 = vld [vmem:[%s3] sm:$0xf]
    %v214 = vld [vmem:[%s3 + $0x4] sm:$0xf]
    %v215 = vld [vmem:[%s3 + $0x8] sm:$0xf]
    %v216 = vld [vmem:[%s3 + $0xc] sm:$0xf]
    %v217 = vld [vmem:[%s3 + $0x10] sm:$0xf]
    %v218 = vld [vmem:[%s3 + $0x14] sm:$0xf]
    %v219 = vld [vmem:[%s3 + $0x18] sm:$0xf]
    %v220 = vld [vmem:[%s3 + $0x1c] sm:$0xf]
    %v221 = vld [vmem:[%s3 + $0x20] sm:$0xf]
    %v222 = vld [vmem:[%s3 + $0x24] sm:$0xf]
    %v223 = vld [vmem:[%s3 + $0x28] sm:$0xf]
    %v224 = vld [vmem:[%s3 + $0x2c] sm:$0xf]
    %v225 = vld [vmem:[%s3 + $0x30] sm:$0xf]
    %v226 = vld [vmem:[%s3 + $0x34] sm:$0xf]
    %v227 = vld [vmem:[%s3 + $0x38] sm:$0xf]
    %v228 = vld [vmem:[%s3 + $0x3c] sm:$0xf]
    %s229 = smul.u32 4, 2
    %s230 = smul.u32 %s229, 1
    %s231 = sshll.u32 %s230, 4
    %232 = dma.done [#allocation3], %s231
    %v233 = vld [vmem:[#allocation2] sm:$0xff]
    %v250 = vunpack.c.l.b16 %v213
    %v251 = vunpack.c.l.b16 %v214
    %v252 = vunpack.c.l.b16 %v215
    %v253 = vunpack.c.l.b16 %v216
    %v254 = vunpack.c.l.b16 %v217
    %v255 = vunpack.c.l.b16 %v218
    %v256 = vunpack.c.l.b16 %v219
    %v257 = vunpack.c.l.b16 %v220
    %v258 = vunpack.c.l.b16 %v221
    %v259 = vunpack.c.l.b16 %v222
    %v260 = vunpack.c.l.b16 %v223
    %v261 = vunpack.c.l.b16 %v224
    %v262 = vunpack.c.l.b16 %v225
    %v263 = vunpack.c.l.b16 %v226
    %v264 = vunpack.c.l.b16 %v227
    %v265 = vunpack.c.l.b16 %v228
    %v266 = vpack.c.b16 %v251, %v250
    %v267 = vpack.c.b16 %v253, %v252
    %v268 = vpack.c.b16 %v255, %v254
    %v269 = vpack.c.b16 %v257, %v256
    %v270 = vpack.c.b16 %v259, %v258
    %v271 = vpack.c.b16 %v261, %v260
    %v272 = vpack.c.b16 %v263, %v262
    %v273 = vpack.c.b16 %v265, %v264
    %282 = vmatprep.subr.bf16.mxu0 0
    %283 = vmatpush1.bf16.msra.mxu0 %v266
    %284 = vmatprep.subr.bf16.mxu0 0
    %285 = vmatpush1.bf16.msra.mxu0 %v267
    %286 = vmatprep.subr.bf16.mxu0 0
    %287 = vmatpush1.bf16.msra.mxu0 %v268
    %288 = vmatprep.subr.bf16.mxu0 0
    %289 = vmatpush1.bf16.msra.mxu0 %v269
    %290 = vmatprep.subr.bf16.mxu0 0
    %291 = vmatpush1.bf16.msra.mxu0 %v270
    %292 = vmatprep.subr.bf16.mxu0 0
    %293 = vmatpush1.bf16.msra.mxu0 %v271
    %294 = vmatprep.subr.bf16.mxu0 0
    %295 = vmatpush1.bf16.msra.mxu0 %v272
    %296 = vmatprep.subr.bf16.mxu0 0
    %297 = vmatpush1.bf16.msra.mxu0 %v273
    %298 = vmatprep.subr.bf16.mxu0 0
    %299 = vmatpush1.bf16.msra.mxu0 0
    %300 = vmatprep.subr.bf16.mxu0 0
    %301 = vmatpush1.bf16.msra.mxu0 0
    %302 = vmatprep.subr.bf16.mxu0 0
    %303 = vmatpush1.bf16.msra.mxu0 0
    %304 = vmatprep.subr.bf16.mxu0 0
    %305 = vmatpush1.bf16.msra.mxu0 0
    %306 = vmatprep.subr.bf16.mxu0 0
    %307 = vmatpush1.bf16.msra.mxu0 0
    %308 = vmatprep.subr.bf16.mxu0 0
    %309 = vmatpush1.bf16.msra.mxu0 0
    %310 = vmatprep.subr.bf16.mxu0 0
    %311 = vmatpush1.bf16.msra.mxu0 0
    %312 = vmatprep.subr.bf16.mxu0 0
    %313 = vmatpush1.bf16.msra.mxu0 0
    %314 = vmatprep.mubr.bf16.mxu0 0
    %315 = vmatmul.mubr.bf16.gmra.mrb[0].mxu0 %v233
    %v316 = vpop.f32.mrb[0].mxu0
    %v317 = vadd.f32 0.0, %v316
    %v318 = vpop.f32.mrb[0].mxu0
    %v319 = vpop.f32.mrb[0].mxu0
    %v320 = vadd.f32 0.0, %v319
    %v321 = vpop.f32.mrb[0].mxu0
    %322 = vdwg.mxu0
    %v323 = vpack.c.bf16 %v320, %v317
    %v328 = vunpack.c.l.b16 %v209
    %v329 = vunpack.c.l.b16 %v210
    %v330 = vunpack.c.l.b16 %v211
    %v331 = vunpack.c.l.b16 %v212
    %v332 = vpack.c.b16 %v329, %v328
    %v333 = vpack.c.b16 %v331, %v330
    %vm334 = vcmask 130048
    %v336 = vsel %vm334, %v332, 0
    %v339 = vsel %vm334, %v333, 0
    %341 = vmatprep.subr.bf16.mxu0 0
    %342 = vmatpush1.bf16.msra.mxu0 %v323
    %343 = vmatprep.subr.bf16.mxu0 0
    %344 = vmatpush1.bf16.msra.mxu0 0
    %345 = vmatprep.subr.bf16.mxu0 0
    %346 = vmatpush1.bf16.msra.mxu0 0
    %347 = vmatprep.subr.bf16.mxu0 0
    %348 = vmatpush1.bf16.msra.mxu0 0
    %349 = vmatprep.subr.bf16.mxu0 0
    %350 = vmatpush1.bf16.msra.mxu0 0
    %351 = vmatprep.subr.bf16.mxu0 0
    %352 = vmatpush1.bf16.msra.mxu0 0
    %353 = vmatprep.subr.bf16.mxu0 0
    %354 = vmatpush1.bf16.msra.mxu0 0
    %355 = vmatprep.subr.bf16.mxu0 0
    %356 = vmatpush1.bf16.msra.mxu0 0
    %357 = vmatprep.subr.bf16.mxu0 0
    %358 = vmatpush1.bf16.msra.mxu0 0
    %359 = vmatprep.subr.bf16.mxu0 0
    %360 = vmatpush1.bf16.msra.mxu0 0
    %361 = vmatprep.subr.bf16.mxu0 0
    %362 = vmatpush1.bf16.msra.mxu0 0
    %363 = vmatprep.subr.bf16.mxu0 0
    %364 = vmatpush1.bf16.msra.mxu0 0
    %365 = vmatprep.subr.bf16.mxu0 0
    %366 = vmatpush1.bf16.msra.mxu0 0
    %367 = vmatprep.subr.bf16.mxu0 0
    %368 = vmatpush1.bf16.msra.mxu0 0
    %369 = vmatprep.subr.bf16.mxu0 0
    %370 = vmatpush1.bf16.msra.mxu0 0
    %371 = vmatprep.subr.bf16.mxu0 0
    %372 = vmatpush1.bf16.msra.mxu0 0
    %373 = vmatprep.mubr.bf16.mxu0 0
    %374 = vmatmul.mubr.bf16.gmra.mrb[0].mxu0 %v336
    %v375 = vpop.f32.mrb[0].mxu0
    %v376 = vadd.f32 0.0, %v375
    %v377 = vpop.f32.mrb[0].mxu0
    %v378 = vpop.f32.mrb[0].mxu0
    %v379 = vadd.f32 0.0, %v378
    %v380 = vpop.f32.mrb[0].mxu0
    %381 = vmatprep.mubr.bf16.mxu0 0
    %382 = vmatmul.mubr.bf16.gmra.mrb[0].mxu0 %v339
    %v383 = vpop.f32.mrb[0].mxu0
    %v384 = vadd.f32 0.0, %v383
    %v385 = vpop.f32.mrb[0].mxu0
    %v386 = vpop.f32.mrb[0].mxu0
    %v387 = vadd.f32 0.0, %v386
    %v388 = vpop.f32.mrb[0].mxu0
    %389 = vdwg.mxu0
    %390 = vst [vmem:[#allocation7] sm:$0xff] %v376
    %391 = vst [vmem:[#allocation7 + $0x8] sm:$0xff] %v379
    %392 = vst [vmem:[#allocation7 + $0x10] sm:$0xff] %v384
    %393 = vst [vmem:[#allocation7 + $0x18] sm:$0xff] %v387
    %s394 = sshll.u32 %s230, 4
    %395 = dma.done %s72, %s394
    %v396 = vld [vmem:[%s71] sm:$0xff]
    %397 = vmatprep.subr.bf16.mxu0 0
    %398 = vmatpush1.bf16.msra.mxu0 %v266
    %399 = vmatprep.subr.bf16.mxu0 0
    %400 = vmatpush1.bf16.msra.mxu0 %v267
    %401 = vmatprep.subr.bf16.mxu0 0
    %402 = vmatpush1.bf16.msra.mxu0 %v268
    %403 = vmatprep.subr.bf16.mxu0 0
    %404 = vmatpush1.bf16.msra.mxu0 %v269
    %405 = vmatprep.subr.bf16.mxu0 0
    %406 = vmatpush1.bf16.msra.mxu0 %v270
    %407 = vmatprep.subr.bf16.mxu0 0
    %408 = vmatpush1.bf16.msra.mxu0 %v271
    %409 = vmatprep.subr.bf16.mxu0 0
    %410 = vmatpush1.bf16.msra.mxu0 %v272
    %411 = vmatprep.subr.bf16.mxu0 0
    %412 = vmatpush1.bf16.msra.mxu0 %v273
    %413 = vmatprep.subr.bf16.mxu0 0
    %414 = vmatpush1.bf16.msra.mxu0 0
    %415 = vmatprep.subr.bf16.mxu0 0
    %416 = vmatpush1.bf16.msra.mxu0 0
    %417 = vmatprep.subr.bf16.mxu0 0
    %418 = vmatpush1.bf16.msra.mxu0 0
    %419 = vmatprep.subr.bf16.mxu0 0
    %420 = vmatpush1.bf16.msra.mxu0 0
    %421 = vmatprep.subr.bf16.mxu0 0
    %422 = vmatpush1.bf16.msra.mxu0 0
    %423 = vmatprep.subr.bf16.mxu0 0
    %424 = vmatpush1.bf16.msra.mxu0 0
    %425 = vmatprep.subr.bf16.mxu0 0
    %426 = vmatpush1.bf16.msra.mxu0 0
    %427 = vmatprep.subr.bf16.mxu0 0
    %428 = vmatpush1.bf16.msra.mxu0 0
    %429 = vmatprep.mubr.bf16.mxu0 0
    %430 = vmatmul.mubr.bf16.gmra.mrb[0].mxu0 %v396
    %v431 = vpop.f32.mrb[0].mxu0
    %v432 = vadd.f32 0.0, %v431
    %v433 = vpop.f32.mrb[0].mxu0
    %v434 = vpop.f32.mrb[0].mxu0
    %v435 = vadd.f32 0.0, %v434
    %v436 = vpop.f32.mrb[0].mxu0
    %437 = vdwg.mxu0
    %v438 = vpack.c.bf16 %v435, %v432
    %439 = vmatprep.subr.bf16.mxu0 0
    %440 = vmatpush1.bf16.msra.mxu0 %v438
    %441 = vmatprep.subr.bf16.mxu0 0
    %442 = vmatpush1.bf16.msra.mxu0 0
    %443 = vmatprep.subr.bf16.mxu0 0
    %444 = vmatpush1.bf16.msra.mxu0 0
    %445 = vmatprep.subr.bf16.mxu0 0
    %446 = vmatpush1.bf16.msra.mxu0 0
    %447 = vmatprep.subr.bf16.mxu0 0
    %448 = vmatpush1.bf16.msra.mxu0 0
    %449 = vmatprep.subr.bf16.mxu0 0
    %450 = vmatpush1.bf16.msra.mxu0 0
    %451 = vmatprep.subr.bf16.mxu0 0
    %452 = vmatpush1.bf16.msra.mxu0 0
    %453 = vmatprep.subr.bf16.mxu0 0
    %454 = vmatpush1.bf16.msra.mxu0 0
    %455 = vmatprep.subr.bf16.mxu0 0
    %456 = vmatpush1.bf16.msra.mxu0 0
    %457 = vmatprep.subr.bf16.mxu0 0
    %458 = vmatpush1.bf16.msra.mxu0 0
    %459 = vmatprep.subr.bf16.mxu0 0
    %460 = vmatpush1.bf16.msra.mxu0 0
    %461 = vmatprep.subr.bf16.mxu0 0
    %462 = vmatpush1.bf16.msra.mxu0 0
    %463 = vmatprep.subr.bf16.mxu0 0
    %464 = vmatpush1.bf16.msra.mxu0 0
    %465 = vmatprep.subr.bf16.mxu0 0
    %466 = vmatpush1.bf16.msra.mxu0 0
    %467 = vmatprep.subr.bf16.mxu0 0
    %468 = vmatpush1.bf16.msra.mxu0 0
    %469 = vmatprep.subr.bf16.mxu0 0
    %470 = vmatpush1.bf16.msra.mxu0 0
    %471 = vmatprep.mubr.bf16.mxu0 0
    %472 = vmatmul.mubr.bf16.gmra.mrb[0].mxu0 %v336
    %v473 = vpop.f32.mrb[0].mxu0
    %v474 = vadd.f32 0.0, %v473
    %v475 = vpop.f32.mrb[0].mxu0
    %v476 = vpop.f32.mrb[0].mxu0
    %v477 = vadd.f32 0.0, %v476
    %v478 = vpop.f32.mrb[0].mxu0
    %479 = vmatprep.mubr.bf16.mxu0 0
    %480 = vmatmul.mubr.bf16.gmra.mrb[0].mxu0 %v339
    %v481 = vpop.f32.mrb[0].mxu0
    %v482 = vadd.f32 0.0, %v481
    %v483 = vpop.f32.mrb[0].mxu0
    %v484 = vpop.f32.mrb[0].mxu0
    %v485 = vadd.f32 0.0, %v484
    %v486 = vpop.f32.mrb[0].mxu0
    %487 = vdwg.mxu0
    %s488 = scalar_lea.vmem [#allocation7], 32
    %489 = vst [vmem:[%s488] sm:$0xff] %v474
    %490 = vst [vmem:[%s488 + $0x8] sm:$0xff] %v477
    %491 = vst [vmem:[%s488 + $0x10] sm:$0xff] %v482
    %492 = vst [vmem:[%s488 + $0x18] sm:$0xff] %v485
    %s493 = sshll.u32 %s230, 4
    %494 = dma.done %s119, %s493
    %v495 = vld [vmem:[%s118] sm:$0xff]
    %496 = vmatprep.subr.bf16.mxu0 0
    %497 = vmatpush1.bf16.msra.mxu0 %v266
    %498 = vmatprep.subr.bf16.mxu0 0
    %499 = vmatpush1.bf16.msra.mxu0 %v267
    %500 = vmatprep.subr.bf16.mxu0 0
    %501 = vmatpush1.bf16.msra.mxu0 %v268
    %502 = vmatprep.subr.bf16.mxu0 0
    %503 = vmatpush1.bf16.msra.mxu0 %v269
    %504 = vmatprep.subr.bf16.mxu0 0
    %505 = vmatpush1.bf16.msra.mxu0 %v270
    %506 = vmatprep.subr.bf16.mxu0 0
    %507 = vmatpush1.bf16.msra.mxu0 %v271
    %508 = vmatprep.subr.bf16.mxu0 0
    %509 = vmatpush1.bf16.msra.mxu0 %v272
    %510 = vmatprep.subr.bf16.mxu0 0
    %511 = vmatpush1.bf16.msra.mxu0 %v273
    %512 = vmatprep.subr.bf16.mxu0 0
    %513 = vmatpush1.bf16.msra.mxu0 0
    %514 = vmatprep.subr.bf16.mxu0 0
    %515 = vmatpush1.bf16.msra.mxu0 0
    %516 = vmatprep.subr.bf16.mxu0 0
    %517 = vmatpush1.bf16.msra.mxu0 0
    %518 = vmatprep.subr.bf16.mxu0 0
    %519 = vmatpush1.bf16.msra.mxu0 0
    %520 = vmatprep.subr.bf16.mxu0 0
    %521 = vmatpush1.bf16.msra.mxu0 0
    %522 = vmatprep.subr.bf16.mxu0 0
    %523 = vmatpush1.bf16.msra.mxu0 0
    %524 = vmatprep.subr.bf16.mxu0 0
    %525 = vmatpush1.bf16.msra.mxu0 0
    %526 = vmatprep.subr.bf16.mxu0 0
    %527 = vmatpush1.bf16.msra.mxu0 0
    %528 = vmatprep.mubr.bf16.mxu0 0
    %529 = vmatmul.mubr.bf16.gmra.mrb[0].mxu0 %v495
    %v530 = vpop.f32.mrb[0].mxu0
    %v531 = vadd.f32 0.0, %v530
    %v532 = vpop.f32.mrb[0].mxu0
    %v533 = vpop.f32.mrb[0].mxu0
    %v534 = vadd.f32 0.0, %v533
    %v535 = vpop.f32.mrb[0].mxu0
    %536 = vdwg.mxu0
    %v537 = vpack.c.bf16 %v534, %v531
    %538 = vmatprep.subr.bf16.mxu0 0
    %539 = vmatpush1.bf16.msra.mxu0 %v537
    %540 = vmatprep.subr.bf16.mxu0 0
    %541 = vmatpush1.bf16.msra.mxu0 0
    %542 = vmatprep.subr.bf16.mxu0 0
    %543 = vmatpush1.bf16.msra.mxu0 0
    %544 = vmatprep.subr.bf16.mxu0 0
    %545 = vmatpush1.bf16.msra.mxu0 0
    %546 = vmatprep.subr.bf16.mxu0 0
    %547 = vmatpush1.bf16.msra.mxu0 0
    %548 = vmatprep.subr.bf16.mxu0 0
    %549 = vmatpush1.bf16.msra.mxu0 0
    %550 = vmatprep.subr.bf16.mxu0 0
    %551 = vmatpush1.bf16.msra.mxu0 0
    %552 = vmatprep.subr.bf16.mxu0 0
    %553 = vmatpush1.bf16.msra.mxu0 0
    %554 = vmatprep.subr.bf16.mxu0 0
    %555 = vmatpush1.bf16.msra.mxu0 0
    %556 = vmatprep.subr.bf16.mxu0 0
    %557 = vmatpush1.bf16.msra.mxu0 0
    %558 = vmatprep.subr.bf16.mxu0 0
    %559 = vmatpush1.bf16.msra.mxu0 0
    %560 = vmatprep.subr.bf16.mxu0 0
    %561 = vmatpush1.bf16.msra.mxu0 0
    %562 = vmatprep.subr.bf16.mxu0 0
    %563 = vmatpush1.bf16.msra.mxu0 0
    %564 = vmatprep.subr.bf16.mxu0 0
    %565 = vmatpush1.bf16.msra.mxu0 0
    %566 = vmatprep.subr.bf16.mxu0 0
    %567 = vmatpush1.bf16.msra.mxu0 0
    %568 = vmatprep.subr.bf16.mxu0 0
    %569 = vmatpush1.bf16.msra.mxu0 0
    %570 = vmatprep.mubr.bf16.mxu0 0
    %571 = vmatmul.mubr.bf16.gmra.mrb[0].mxu0 %v336
    %v572 = vpop.f32.mrb[0].mxu0
    %v573 = vadd.f32 0.0, %v572
    %v574 = vpop.f32.mrb[0].mxu0
    %v575 = vpop.f32.mrb[0].mxu0
    %v576 = vadd.f32 0.0, %v575
    %v577 = vpop.f32.mrb[0].mxu0
    %578 = vmatprep.mubr.bf16.mxu0 0
    %579 = vmatmul.mubr.bf16.gmra.mrb[0].mxu0 %v339
    %v580 = vpop.f32.mrb[0].mxu0
    %v581 = vadd.f32 0.0, %v580
    %v582 = vpop.f32.mrb[0].mxu0
    %v583 = vpop.f32.mrb[0].mxu0
    %v584 = vadd.f32 0.0, %v583
    %v585 = vpop.f32.mrb[0].mxu0
    %586 = vdwg.mxu0
    %s587 = scalar_lea.vmem [#allocation7], 64
    %588 = vst [vmem:[%s587] sm:$0xff] %v573
    %589 = vst [vmem:[%s587 + $0x8] sm:$0xff] %v576
    %590 = vst [vmem:[%s587 + $0x10] sm:$0xff] %v581
    %591 = vst [vmem:[%s587 + $0x18] sm:$0xff] %v584
    %s592 = sshll.u32 %s230, 4
    %593 = dma.done %s166, %s592
    %v594 = vld [vmem:[%s165] sm:$0xff]
    %595 = vmatprep.subr.bf16.mxu0 0
    %596 = vmatpush1.bf16.msra.mxu0 %v266
    %597 = vmatprep.subr.bf16.mxu0 0
    %598 = vmatpush1.bf16.msra.mxu0 %v267
    %599 = vmatprep.subr.bf16.mxu0 0
    %600 = vmatpush1.bf16.msra.mxu0 %v268
    %601 = vmatprep.subr.bf16.mxu0 0
    %602 = vmatpush1.bf16.msra.mxu0 %v269
    %603 = vmatprep.subr.bf16.mxu0 0
    %604 = vmatpush1.bf16.msra.mxu0 %v270
    %605 = vmatprep.subr.bf16.mxu0 0
    %606 = vmatpush1.bf16.msra.mxu0 %v271
    %607 = vmatprep.subr.bf16.mxu0 0
    %608 = vmatpush1.bf16.msra.mxu0 %v272
    %609 = vmatprep.subr.bf16.mxu0 0
    %610 = vmatpush1.bf16.msra.mxu0 %v273
    %611 = vmatprep.subr.bf16.mxu0 0
    %612 = vmatpush1.bf16.msra.mxu0 0
    %613 = vmatprep.subr.bf16.mxu0 0
    %614 = vmatpush1.bf16.msra.mxu0 0
    %615 = vmatprep.subr.bf16.mxu0 0
    %616 = vmatpush1.bf16.msra.mxu0 0
    %617 = vmatprep.subr.bf16.mxu0 0
    %618 = vmatpush1.bf16.msra.mxu0 0
    %619 = vmatprep.subr.bf16.mxu0 0
    %620 = vmatpush1.bf16.msra.mxu0 0
    %621 = vmatprep.subr.bf16.mxu0 0
    %622 = vmatpush1.bf16.msra.mxu0 0
    %623 = vmatprep.subr.bf16.mxu0 0
    %624 = vmatpush1.bf16.msra.mxu0 0
    %625 = vmatprep.subr.bf16.mxu0 0
    %626 = vmatpush1.bf16.msra.mxu0 0
    %627 = vmatprep.mubr.bf16.mxu0 0
    %628 = vmatmul.mubr.bf16.gmra.mrb[0].mxu0 %v594
    %v629 = vpop.f32.mrb[0].mxu0
    %v630 = vadd.f32 0.0, %v629
    %v631 = vpop.f32.mrb[0].mxu0
    %v632 = vpop.f32.mrb[0].mxu0
    %v633 = vadd.f32 0.0, %v632
    %v634 = vpop.f32.mrb[0].mxu0
    %635 = vdwg.mxu0
    %v636 = vpack.c.bf16 %v633, %v630
    %637 = vmatprep.subr.bf16.mxu0 0
    %638 = vmatpush1.bf16.msra.mxu0 %v636
    %639 = vmatprep.subr.bf16.mxu0 0
    %640 = vmatpush1.bf16.msra.mxu0 0
    %641 = vmatprep.subr.bf16.mxu0 0
    %642 = vmatpush1.bf16.msra.mxu0 0
    %643 = vmatprep.subr.bf16.mxu0 0
    %644 = vmatpush1.bf16.msra.mxu0 0
    %645 = vmatprep.subr.bf16.mxu0 0
    %646 = vmatpush1.bf16.msra.mxu0 0
    %647 = vmatprep.subr.bf16.mxu0 0
    %648 = vmatpush1.bf16.msra.mxu0 0
    %649 = vmatprep.subr.bf16.mxu0 0
    %650 = vmatpush1.bf16.msra.mxu0 0
    %651 = vmatprep.subr.bf16.mxu0 0
    %652 = vmatpush1.bf16.msra.mxu0 0
    %653 = vmatprep.subr.bf16.mxu0 0
    %654 = vmatpush1.bf16.msra.mxu0 0
    %655 = vmatprep.subr.bf16.mxu0 0
    %656 = vmatpush1.bf16.msra.mxu0 0
    %657 = vmatprep.subr.bf16.mxu0 0
    %658 = vmatpush1.bf16.msra.mxu0 0
    %659 = vmatprep.subr.bf16.mxu0 0
    %660 = vmatpush1.bf16.msra.mxu0 0
    %661 = vmatprep.subr.bf16.mxu0 0
    %662 = vmatpush1.bf16.msra.mxu0 0
    %663 = vmatprep.subr.bf16.mxu0 0
    %664 = vmatpush1.bf16.msra.mxu0 0
    %665 = vmatprep.subr.bf16.mxu0 0
    %666 = vmatpush1.bf16.msra.mxu0 0
    %667 = vmatprep.subr.bf16.mxu0 0
    %668 = vmatpush1.bf16.msra.mxu0 0
    %669 = vmatprep.mubr.bf16.mxu0 0
    %670 = vmatmul.mubr.bf16.gmra.mrb[0].mxu0 %v336
    %v671 = vpop.f32.mrb[0].mxu0
    %v672 = vadd.f32 0.0, %v671
    %v673 = vpop.f32.mrb[0].mxu0
    %v674 = vpop.f32.mrb[0].mxu0
    %v675 = vadd.f32 0.0, %v674
    %v676 = vpop.f32.mrb[0].mxu0
    %677 = vmatprep.mubr.bf16.mxu0 0
    %678 = vmatmul.mubr.bf16.gmra.mrb[0].mxu0 %v339
    %v679 = vpop.f32.mrb[0].mxu0
    %v680 = vadd.f32 0.0, %v679
    %v681 = vpop.f32.mrb[0].mxu0
    %v682 = vpop.f32.mrb[0].mxu0
    %v683 = vadd.f32 0.0, %v682
    %v684 = vpop.f32.mrb[0].mxu0
    %685 = vdwg.mxu0
    %s686 = scalar_lea.vmem [#allocation7], 96
    %687 = vst [vmem:[%s686] sm:$0xff] %v672
    %688 = vst [vmem:[%s686 + $0x8] sm:$0xff] %v675
    %689 = vst [vmem:[%s686 + $0x10] sm:$0xff] %v680
    %690 = vst [vmem:[%s686 + $0x18] sm:$0xff] %v683
    // Predicated region
    $region146: #{_apply.1} parent=1 // pred_check
      _
    $region147: #{_apply.1} parent=1 // pred_check_branch
      %692 = sbr.rel (0) target = $region149
    $region148: #{_apply.1} parent=1 // pred_region
      // Predicated region
      $region150: #{_apply.1} parent=148 // pred_check
        _
      $region151: #{_apply.1} parent=148 // pred_check_branch
        %694 = sbr.rel (0) target = $region153
      $region152: #{_apply.1} parent=148 // pred_region
        // Predicated region
        $region154: #{_apply.1} parent=152 // pred_check
          _
        $region155: #{_apply.1} parent=152 // pred_check_branch
          %696 = sbr.rel (0) target = $region157
        $region156: #{_apply.1} parent=152 // pred_region
          // Predicated region
          $region169: #{_apply.1} parent=156 // pred_check
            _
          $region170: #{_apply.1} parent=156 // pred_check_branch
            %733 = sbr.rel (0) target = $region172
          $region171: #{_apply.1} parent=156 // pred_region
            loop: start=0, step=1, limit=1
            $region173: #{_apply.1} parent=171 // loop_pre_header
              _
            $region174: #{_apply.1} parent=171 // loop_header
              %s735 = sphi 0, %s739
              %p736 = scmp.ge.s32.totalorder %s735, 1
              %s740 = sphi [#allocation7], [#allocation7]
              %s741 = sphi %s5, %s5
            $region175: #{_apply.1} parent=171 // loop_header_branch
              %738 = sbr.rel (%p736) target = $region179
            $region176: #{_apply.1} parent=171 // loop_body
              %v742 = vld [vmem:[%s740] sm:$0xff]
              %743 = vst [vmem:[%s741] sm:$0xff] %v742
              %v744 = vld [vmem:[%s740 + $0x8] sm:$0xff]
              %745 = vst [vmem:[%s741 + $0x8] sm:$0xff] %v744
              %v746 = vld [vmem:[%s740 + $0x10] sm:$0xff]
              %747 = vst [vmem:[%s741 + $0x10] sm:$0xff] %v746
              %v748 = vld [vmem:[%s740 + $0x20] sm:$0xff]
              %749 = vst [vmem:[%s741 + $0x18] sm:$0xff] %v748
              %v750 = vld [vmem:[%s740 + $0x28] sm:$0xff]
              %751 = vst [vmem:[%s741 + $0x20] sm:$0xff] %v750
              %v752 = vld [vmem:[%s740 + $0x30] sm:$0xff]
              %753 = vst [vmem:[%s741 + $0x28] sm:$0xff] %v752
              %v754 = vld [vmem:[%s740 + $0x40] sm:$0xff]
              %755 = vst [vmem:[%s741 + $0x30] sm:$0xff] %v754
              %v756 = vld [vmem:[%s740 + $0x48] sm:$0xff]
              %757 = vst [vmem:[%s741 + $0x38] sm:$0xff] %v756
              %v758 = vld [vmem:[%s740 + $0x50] sm:$0xff]
              %759 = vst [vmem:[%s741 + $0x40] sm:$0xff] %v758
              %v760 = vld [vmem:[%s740 + $0x60] sm:$0xff]
              %761 = vst [vmem:[%s741 + $0x48] sm:$0xff] %v760
              %v762 = vld [vmem:[%s740 + $0x68] sm:$0xff]
              %763 = vst [vmem:[%s741 + $0x50] sm:$0xff] %v762
              %v764 = vld [vmem:[%s740 + $0x70] sm:$0xff]
              %765 = vst [vmem:[%s741 + $0x58] sm:$0xff] %v764
            $region177: #{_apply.1} parent=171 // loop_footer
              %s739 = sadd.s32 1, %s735
            $region178: #{_apply.1} parent=171 // loop_footer_branch
              %734 = sbr.rel target = $region174
            $region179: #{_apply.1} parent=171 // loop_exit
              _
          $region172: #{_apply.1} parent=156 // pred_fallthru
            _
          // Predicated region
          $region180: #{_apply.1} parent=156 // pred_check
            _
          $region181: #{_apply.1} parent=156 // pred_check_branch
            %767 = sbr.rel target = $region183
          $region182: #{_apply.1} parent=156 // pred_region
            _
          $region183: #{_apply.1} parent=156 // pred_fallthru
            _
        $region157: #{_apply.1} parent=152 // pred_fallthru
          _
        // Predicated region
        $region158: #{_apply.1} parent=152 // pred_check
          _
        $region159: #{_apply.1} parent=152 // pred_check_branch
          %698 = sbr.rel target = $region161
        $region160: #{_apply.1} parent=152 // pred_region
          loop: start=0, step=1, limit=1
          $region162: #{_apply.1} parent=160 // loop_pre_header
            _
          $region163: #{_apply.1} parent=160 // loop_header
            %s701 = sphi 0, %s705
            %p702 = scmp.ge.s32.totalorder %s701, 1
            %s706 = sphi [#allocation7], [#allocation7]
            %s707 = sphi %s5, %s5
          $region164: #{_apply.1} parent=160 // loop_header_branch
            %704 = sbr.rel (%p702) target = $region168
          $region165: #{_apply.1} parent=160 // loop_body
            %v708 = vld [vmem:[%s706] sm:$0xff]
            %709 = vst [vmem:[%s707] sm:$0xff] %v708
            %v710 = vld [vmem:[%s706 + $0x8] sm:$0xff]
            %711 = vst [vmem:[%s707 + $0x8] sm:$0xff] %v710
            %v712 = vld [vmem:[%s706 + $0x10] sm:$0xff]
            %713 = vst [vmem:[%s707 + $0x10] sm:$0xff] %v712
            %v714 = vld [vmem:[%s706 + $0x20] sm:$0xff]
            %715 = vst [vmem:[%s707 + $0x18] sm:$0xff] %v714
            %v716 = vld [vmem:[%s706 + $0x28] sm:$0xff]
            %717 = vst [vmem:[%s707 + $0x20] sm:$0xff] %v716
            %v718 = vld [vmem:[%s706 + $0x30] sm:$0xff]
            %719 = vst [vmem:[%s707 + $0x28] sm:$0xff] %v718
            %v720 = vld [vmem:[%s706 + $0x40] sm:$0xff]
            %721 = vst [vmem:[%s707 + $0x30] sm:$0xff] %v720
            %v722 = vld [vmem:[%s706 + $0x48] sm:$0xff]
            %723 = vst [vmem:[%s707 + $0x38] sm:$0xff] %v722
            %v724 = vld [vmem:[%s706 + $0x50] sm:$0xff]
            %725 = vst [vmem:[%s707 + $0x40] sm:$0xff] %v724
            %v726 = vld [vmem:[%s706 + $0x60] sm:$0xff]
            %727 = vst [vmem:[%s707 + $0x48] sm:$0xff] %v726
            %v728 = vld [vmem:[%s706 + $0x68] sm:$0xff]
            %729 = vst [vmem:[%s707 + $0x50] sm:$0xff] %v728
            %v730 = vld [vmem:[%s706 + $0x70] sm:$0xff]
            %731 = vst [vmem:[%s707 + $0x58] sm:$0xff] %v730
          $region166: #{_apply.1} parent=160 // loop_footer
            %s705 = sadd.s32 1, %s701
          $region167: #{_apply.1} parent=160 // loop_footer_branch
            %700 = sbr.rel target = $region163
          $region168: #{_apply.1} parent=160 // loop_exit
            _
        $region161: #{_apply.1} parent=152 // pred_fallthru
          _
      $region153: #{_apply.1} parent=148 // pred_fallthru
        _
      %768 = vnop
    $region149: #{_apply.1} parent=1 // pred_fallthru
      _
    // Predicated region
    $region184: #{_apply.1} parent=1 // pred_check
      _
    $region185: #{_apply.1} parent=1 // pred_check_branch
      %770 = sbr.rel (0) target = $region187
    $region186: #{_apply.1} parent=1 // pred_region
      _
    $region187: #{_apply.1} parent=1 // pred_fallthru
      _
  %771 = vsyncmov [#allocation3]
  %s772 = vpop.sfrf %771
  %p773 = scmp.eq.s32.totalorder %s772, 0
  %p774 = pneg %p773
  %776 = shalt.err (%p774)
  %s777 = scalar_lea.sflag [#allocation3], 1
  %778 = vsyncmov %s777
  %s779 = vpop.sfrf %778
  %p780 = scmp.eq.s32.totalorder %s779, 0
  %p781 = pneg %p780
  %783 = shalt.err (%p781)
  %s784 = scalar_lea.sflag [#allocation3], 2
  %785 = vsyncmov %s784
  %s786 = vpop.sfrf %785
  %p787 = scmp.eq.s32.totalorder %s786, 0
  %p788 = pneg %p787
  %790 = shalt.err (%p788)
  %s791 = scalar_lea.sflag [#allocation3], 3
  %792 = vsyncmov %s791
  %s793 = vpop.sfrf %792
  %p794 = scmp.eq.s32.totalorder %s793, 0
  %p795 = pneg %p794
  %797 = shalt.err (%p795)

</llo_original>
